<compile_context>
chip_gen: v5e
topology: v5e:2x2
jax: 0.10.0
libtpu: 0.0.40
codegen_flags: <defaults>
</compile_context>

<pallas_src>
import functools

import jax
import jax.numpy as jnp
from jax.experimental import pallas as pl
from jax.experimental.pallas import tpu as pltpu


def _round_up(x: int, m: int) -> int:
    return ((x + m - 1) // m) * m


def _linear_relu_kernel(x_ref, wt_ref, b_ref, o_ref, acc_ref):
    """One (tm, tn) output tile; K-reduction runs over grid axis 2.

    x_ref  : (tm, tk)  compute dtype (bf16 by default)
    wt_ref : (tk, tn)  compute dtype -- weight already transposed to [K, N]
    b_ref  : (1,  tn)  f32 bias slice (only consumed on the final K step)
    o_ref  : (tm, tn)  output dtype
    acc_ref: (tm, tn)  f32 VMEM accumulator (persists across K steps)
    """
    k = pl.program_id(2)

    @pl.when(k == 0)
    def _():
        acc_ref[...] = jnp.zeros_like(acc_ref)

    # MXU matmul with f32 accumulation; no in-kernel transpose.
    acc_ref[...] += jnp.dot(
        x_ref[...], wt_ref[...], preferred_element_type=jnp.float32
    )

    # Epilogue (bias + ReLU + cast) only once, on the last K step.
    @pl.when(k == pl.num_programs(2) - 1)
    def _():
        y = acc_ref[...] + b_ref[...].astype(jnp.float32)
        o_ref[...] = jnp.maximum(y, 0.0).astype(o_ref.dtype)


@functools.partial(jax.jit, static_argnames=("compute_dtype",))
def linear_relu(x, weight, bias, *, compute_dtype=jnp.bfloat16):
    """y = relu(x @ weight.T + bias), PyTorch nn.Linear weight convention.

    x      : [batch, in_features]
    weight : [out_features, in_features]
    bias   : [out_features] (or [1, out_features])
    """
    batch, in_features = x.shape
    out_features = weight.shape[0]
    out_dtype = x.dtype

    # One-time layout fix + compute-dtype cast (done outside the kernel so
    # the kernel streams bf16 and never transposes on the XLU).
    x_c = x.astype(compute_dtype)
    w_t = weight.T.astype(compute_dtype)          # [K, N]
    b = jnp.reshape(bias, (1, out_features)).astype(jnp.float32)

    # --- Tile sizes -------------------------------------------------------
    # N padded to a multiple of 128 -> every output store is a full, unmasked
    # lane-dense vst.  256-wide M/N tiles fill the v6e/v7x MXU (128-aligned
    # tiles still serve v5e).  tk capped so double-buffered bf16 tiles stay
    # well under v7x's 64 MiB VMEM.
    tm = min(256, _round_up(batch, 8))
    tn = min(256, _round_up(out_features, 128))
    tk = min(2048, _round_up(in_features, 128))

    m_p = _round_up(batch, tm)
    n_p = _round_up(out_features, tn)
    k_p = _round_up(in_features, tk)

    # Zero padding: extra K columns contribute 0 to the dot product; extra
    # M rows / N columns are sliced off after the call.
    x_c = jnp.pad(x_c, ((0, m_p - batch), (0, k_p - in_features)))
    w_t = jnp.pad(w_t, ((0, k_p - in_features), (0, n_p - out_features)))
    b = jnp.pad(b, ((0, 0), (0, n_p - out_features)))

    grid = (m_p // tm, n_p // tn, k_p // tk)

    out_p = pl.pallas_call(
        _linear_relu_kernel,
        out_shape=jax.ShapeDtypeStruct((m_p, n_p), out_dtype),
        grid_spec=pltpu.PrefetchScalarGridSpec(
            num_scalar_prefetch=0,
            grid=grid,
            in_specs=[
                pl.BlockSpec((tm, tk), lambda i, j, k: (i, k)),   # x tile
                pl.BlockSpec((tk, tn), lambda i, j, k: (k, j)),   # W^T tile
                pl.BlockSpec((1, tn), lambda i, j, k: (0, j)),    # bias tile
            ],
            out_specs=pl.BlockSpec((tm, tn), lambda i, j, k: (i, j)),
            scratch_shapes=[pltpu.VMEM((tm, tn), jnp.float32)],
        ),
        compiler_params=pltpu.CompilerParams(
            dimension_semantics=("parallel", "parallel", "arbitrary"),
            vmem_limit_bytes=32 * 1024 * 1024,
        ),
    )(x_c, w_t, b)

    return out_p[:batch, :out_features]


def init_linear_params(key, in_features, out_features, dtype=jnp.float32):
    """Xavier-uniform weight (PyTorch nn.init.xavier_uniform_), zero bias."""
    bound = (6.0 / (in_features + out_features)) ** 0.5
    weight = jax.random.uniform(
        key, (out_features, in_features), dtype=dtype, minval=-bound, maxval=bound
    )
    bias = jnp.zeros((out_features,), dtype=dtype)
    return weight, bias


if __name__ == "__main__":
    # TODO(synk): batch_norm=True branch (BatchNorm1d with batch statistics) not
    # implemented; default constructor arg batch_norm=False is reproduced exactly.
    batch, in_features, out_features = 8, 32, 64

    key = jax.random.PRNGKey(0)
    kx, kw = jax.random.split(key)
    x = jax.random.normal(kx, (batch, in_features), dtype=jnp.float32)
    weight, bias = init_linear_params(kw, in_features, out_features)

    out = linear_relu(x, weight, bias)
    out = jax.block_until_ready(out)
    assert out.shape == (batch, out_features)

    # Reference with numerics matching the kernel (bf16 operands, f32 acc).
    ref_bf16 = jnp.maximum(
        jnp.dot(
            x.astype(jnp.bfloat16),
            weight.T.astype(jnp.bfloat16),
            preferred_element_type=jnp.float32,
        )
        + bias.reshape(1, -1),
        0.0,
    )
    assert jnp.allclose(out, ref_bf16, atol=1e-4, rtol=1e-4)

    # Full-precision reference (looser tolerance due to bf16 MXU inputs).
    ref_f32 = jnp.maximum(x @ weight.T + bias.reshape(1, -1), 0.0)
    assert jnp.allclose(out, ref_f32, atol=2e-2, rtol=2e-2)

    print("KERNEL_OK")
</pallas_src>

<mosaic_0001>
module attributes {stable_mosaic.version = 11 : i64} {
  func.func @_linear_relu_kernel(%arg0: i32, %arg1: i32, %arg2: i32, %arg3: memref<8x128xbf16, #tpu.memory_space<vmem>>, %arg4: memref<128x128xbf16, #tpu.memory_space<vmem>>, %arg5: memref<1x128xf32, #tpu.memory_space<vmem>>, %arg6: memref<8x128xf32, #tpu.memory_space<vmem>>, %arg7: memref<8x128xf32, #tpu.memory_space<vmem>>) attributes {dimension_semantics = [#tpu.dimension_semantics<parallel>, #tpu.dimension_semantics<parallel>, #tpu.dimension_semantics<arbitrary>], iteration_bounds = array<i64: 1, 1, 1>, scalar_prefetch = 0 : i64, scratch_operands = 1 : i64, tpu.core_type = #tpu.core_type<tc>, window_params = [{transform_indices = @transform_0, window_bounds = array<i64: 8, 128>}, {transform_indices = @transform_1, window_bounds = array<i64: 128, 128>}, {transform_indices = @transform_2, window_bounds = array<i64: 1, 128>}, {transform_indices = @transform_3, window_bounds = array<i64: 8, 128>}]} {
    %c0_i32 = arith.constant 0 : i32
    %0 = arith.cmpi eq, %arg2, %c0_i32 : i32
    %1 = arith.extui %0 : i1 to i32
    %c0_i32_0 = arith.constant 0 : i32
    %2 = arith.cmpi ne, %1, %c0_i32_0 : i32
    scf.if %2 {
      %cst_10 = arith.constant 0.000000e+00 : f32
      %12 = vector.broadcast %cst_10 : f32 to vector<8x128xf32>
      %c0_11 = arith.constant 0 : index
      %c0_12 = arith.constant 0 : index
      %13 = vector.load %arg7[%c0_11, %c0_12] : memref<8x128xf32, #tpu.memory_space<vmem>>, vector<8x128xf32>
      tpu.vector_store %arg7[%c0_11, %c0_12], %12 {strides = array<i32>} : memref<8x128xf32, #tpu.memory_space<vmem>>, vector<8x128xf32>,
    } else {
    }
    %c0 = arith.constant 0 : index
    %c0_1 = arith.constant 0 : index
    %3 = vector.load %arg7[%c0, %c0_1] : memref<8x128xf32, #tpu.memory_space<vmem>>, vector<8x128xf32>
    %c0_2 = arith.constant 0 : index
    %c0_3 = arith.constant 0 : index
    %4 = vector.load %arg3[%c0_2, %c0_3] : memref<8x128xbf16, #tpu.memory_space<vmem>>, vector<8x128xbf16>
    %c0_4 = arith.constant 0 : index
    %c0_5 = arith.constant 0 : index
    %5 = vector.load %arg4[%c0_4, %c0_5] : memref<128x128xbf16, #tpu.memory_space<vmem>>, vector<128x128xbf16>
    %cst = arith.constant dense<0.000000e+00> : vector<8x128xf32>
    %6 = tpu.matmul %4, %5, %cst {dimension_numbers = #tpu.dot_dimension_numbers<[1], [0], [0], [1], [0, 0, 1, 1], [], []>} : vector<8x128xbf16>, vector<128x128xbf16>, vector<8x128xf32> -> vector<8x128xf32>
    %7 = arith.addf %3, %6 : vector<8x128xf32>
    %c0_6 = arith.constant 0 : index
    %c0_7 = arith.constant 0 : index
    %8 = vector.load %arg7[%c0_6, %c0_7] : memref<8x128xf32, #tpu.memory_space<vmem>>, vector<8x128xf32>
    tpu.vector_store %arg7[%c0_6, %c0_7], %7 {strides = array<i32>} : memref<8x128xf32, #tpu.memory_space<vmem>>, vector<8x128xf32>,
    %c0_i32_8 = arith.constant 0 : i32
    %9 = arith.cmpi eq, %arg2, %c0_i32_8 : i32
    %10 = arith.extui %9 : i1 to i32
    %c0_i32_9 = arith.constant 0 : i32
    %11 = arith.cmpi ne, %10, %c0_i32_9 : i32
    scf.if %11 {
      %c0_10 = arith.constant 0 : index
      %c0_11 = arith.constant 0 : index
      %12 = vector.load %arg7[%c0_10, %c0_11] : memref<8x128xf32, #tpu.memory_space<vmem>>, vector<8x128xf32>
      %c0_12 = arith.constant 0 : index
      %c0_13 = arith.constant 0 : index
      %13 = vector.load %arg5[%c0_12, %c0_13] : memref<1x128xf32, #tpu.memory_space<vmem>>, vector<1x128xf32>
      %14 = vector.broadcast %13 : vector<1x128xf32> to vector<8x128xf32>
      %15 = arith.addf %12, %14 : vector<8x128xf32>
      %cst_14 = arith.constant 0.000000e+00 : f32
      %16 = vector.broadcast %cst_14 : f32 to vector<8x128xf32>
      %17 = arith.maximumf %15, %16 : vector<8x128xf32>
      %c0_15 = arith.constant 0 : index
      %c0_16 = arith.constant 0 : index
      %18 = vector.load %arg6[%c0_15, %c0_16] : memref<8x128xf32, #tpu.memory_space<vmem>>, vector<8x128xf32>
      tpu.vector_store %arg6[%c0_15, %c0_16], %17 {strides = array<i32>} : memref<8x128xf32, #tpu.memory_space<vmem>>, vector<8x128xf32>,
    } else {
    }
    return
  }
  func.func @transform_0(%arg0: i32, %arg1: i32, %arg2: i32) -> (i32, i32) {
    %c0_i32 = arith.constant 0 : i32
    return %arg0, %arg2 : i32, i32
  }
  func.func @transform_1(%arg0: i32, %arg1: i32, %arg2: i32) -> (i32, i32) {
    %c0_i32 = arith.constant 0 : i32
    return %arg2, %arg1 : i32, i32
  }
  func.func @transform_2(%arg0: i32, %arg1: i32, %arg2: i32) -> (i32, i32) {
    %c0_i32 = arith.constant 0 : i32
    %c0_i32_0 = arith.constant 0 : i32
    return %c0_i32, %arg1 : i32, i32
  }
  func.func @transform_3(%arg0: i32, %arg1: i32, %arg2: i32) -> (i32, i32) {
    %c0_i32 = arith.constant 0 : i32
    return %arg0, %arg1 : i32, i32
  }
}

</mosaic_0001>

<llo_original>
// kernel: linear_relu.1
$region0: #{linear_relu.1}
  #allocation0 [shape = 'u32[]', space=smem, size = 0x4, offset = 0x4, fixed_abs, tag = 'smem constant byte address 0x4 - core index']
  #allocation1 [shape = 'u32[72,128]{1,0:T(1,128)}', space=vmem, size = 0x9000, scoped, tag = 'internal scratch']
  #allocation2 [shape = 'f32[8,128]{1,0:T(8,128)}', space=vmem, size = 0x1000, scoped, tag = 'scratch operand']
  %s0 = inlined_call_operand.vmem [shape: bf16[8,128], index: 0, kind: input, shape index: {}]
  %s1 = inlined_call_operand.vmem [shape: bf16[128,128], index: 1, kind: input, shape index: {}]
  %s2 = inlined_call_operand.vmem [shape: f32[1,128], index: 2, kind: input, shape index: {}]
  %s3 = inlined_call_operand.hbm [shape: f32[8,128], index: 3, kind: output, shape index: {}]
  %s4 = sld [smem:[#allocation0]]
  $region30: #{linear_relu.1} parent=0
    _
  %s6 = ssub.s32 1, %s4
  %s7 = scalar_select 0, %s6, %s4
  $region1: #{linear_relu.1} parent=0
    #allocation3 [shape = 'u8[4096]{0}', space=vmem, size = 0x1000, scoped, tag = 'output window, operand 0, single buffered']
    #allocation4 [shape = 's32[1]{0}', space=sflag, size = 0x4, scoped, tag = 'scoped memory for linear_relu.1']
    %8 = vsyncpa [#allocation4], 0
    // Predicated region
    $region2: #{linear_relu.1} parent=1 // pred_check
      _
    $region3: #{linear_relu.1} parent=1 // pred_check_branch
      %10 = sbr.rel (0) target = $region5
    $region4: #{linear_relu.1} parent=1 // pred_region
      _
    $region5: #{linear_relu.1} parent=1 // pred_fallthru
      _
    // Predicated region
    $region6: #{linear_relu.1} parent=1 // pred_check
      _
    $region7: #{linear_relu.1} parent=1 // pred_check_branch
      %12 = sbr.rel (0) target = $region9
    $region8: #{linear_relu.1} parent=1 // pred_region
      _
    $region9: #{linear_relu.1} parent=1 // pred_fallthru
      _
    // Predicated region
    $region10: #{linear_relu.1} parent=1 // pred_check
      _
    $region11: #{linear_relu.1} parent=1 // pred_check_branch
      %14 = sbr.rel (0) target = $region13
    $region12: #{linear_relu.1} parent=1 // pred_region
      _
    $region13: #{linear_relu.1} parent=1 // pred_fallthru
      _
    %p15 = scmp.eq.s32.totalorder 0, 0
    // Predicated region
    $region14: #{linear_relu.1} parent=1 // pred_check
      %p16 = pneg %p15
    $region15: #{linear_relu.1} parent=1 // pred_check_branch
      %18 = sbr.rel (%p16) target = $region17
    $region16: #{linear_relu.1} parent=1 // pred_region
      %19 = vst [vmem:[#allocation2] sm:$0xff] 0.0
    $region17: #{linear_relu.1} parent=1 // pred_fallthru
      _
    %v20 = vld [vmem:[#allocation2] sm:$0xff]
    %v21 = vld [vmem:[%s0] sm:$0xf]
    %v22 = vld [vmem:[%s1] sm:$0xf]
    %v23 = vld [vmem:[%s1 + $0x4] sm:$0xf]
    %v24 = vld [vmem:[%s1 + $0x8] sm:$0xf]
    %v25 = vld [vmem:[%s1 + $0xc] sm:$0xf]
    %v26 = vld [vmem:[%s1 + $0x10] sm:$0xf]
    %v27 = vld [vmem:[%s1 + $0x14] sm:$0xf]
    %v28 = vld [vmem:[%s1 + $0x18] sm:$0xf]
    %v29 = vld [vmem:[%s1 + $0x1c] sm:$0xf]
    %v30 = vld [vmem:[%s1 + $0x20] sm:$0xf]
    %v31 = vld [vmem:[%s1 + $0x24] sm:$0xf]
    %v32 = vld [vmem:[%s1 + $0x28] sm:$0xf]
    %v33 = vld [vmem:[%s1 + $0x2c] sm:$0xf]
    %v34 = vld [vmem:[%s1 + $0x30] sm:$0xf]
    %v35 = vld [vmem:[%s1 + $0x34] sm:$0xf]
    %v36 = vld [vmem:[%s1 + $0x38] sm:$0xf]
    %v37 = vld [vmem:[%s1 + $0x3c] sm:$0xf]
    %v54 = vunpack.c.l.b16 %v22
    %v55 = vunpack.c.l.b16 %v23
    %v56 = vunpack.c.l.b16 %v24
    %v57 = vunpack.c.l.b16 %v25
    %v58 = vunpack.c.l.b16 %v26
    %v59 = vunpack.c.l.b16 %v27
    %v60 = vunpack.c.l.b16 %v28
    %v61 = vunpack.c.l.b16 %v29
    %v62 = vunpack.c.l.b16 %v30
    %v63 = vunpack.c.l.b16 %v31
    %v64 = vunpack.c.l.b16 %v32
    %v65 = vunpack.c.l.b16 %v33
    %v66 = vunpack.c.l.b16 %v34
    %v67 = vunpack.c.l.b16 %v35
    %v68 = vunpack.c.l.b16 %v36
    %v69 = vunpack.c.l.b16 %v37
    %v70 = vpack.c.b16 %v55, %v54
    %v71 = vpack.c.b16 %v57, %v56
    %v72 = vpack.c.b16 %v59, %v58
    %v73 = vpack.c.b16 %v61, %v60
    %v74 = vpack.c.b16 %v63, %v62
    %v75 = vpack.c.b16 %v65, %v64
    %v76 = vpack.c.b16 %v67, %v66
    %v77 = vpack.c.b16 %v69, %v68
    %86 = vmatpush.bf16.msra.mxu0 %v77
    %87 = vmatpush.bf16.msra.mxu0 %v76
    %88 = vmatpush.bf16.msra.mxu0 %v75
    %89 = vmatpush.bf16.msra.mxu0 %v74
    %90 = vmatpush.bf16.msra.mxu0 %v73
    %91 = vmatpush.bf16.msra.mxu0 %v72
    %92 = vmatpush.bf16.msra.mxu0 %v71
    %93 = vmatpush.bf16.msra.mxu0 %v70
    %94 = vmatmul.bf16.gmra.mxu0 %v21
    %v95 = vpop.f32.mrf.mxu0
    %v96 = vadd.f32 0.0, %v95
    %v97 = vpop.f32.mrf.mxu0
    %98 = vdwg.mxu0
    %v99 = vadd.f32 %v20, %v96
    %100 = vst [vmem:[#allocation2] sm:$0xff] %v99
    // Predicated region
    $region18: #{linear_relu.1} parent=1 // pred_check
      %p101 = pneg %p15
    $region19: #{linear_relu.1} parent=1 // pred_check_branch
      %103 = sbr.rel (%p101) target = $region21
    $region20: #{linear_relu.1} parent=1 // pred_region
      %v104 = vld [vmem:[#allocation2] sm:$0xff]
      %v105 = vld [vmem:[%s2] sm:$0x1]
      %v107 = vperm.slane %v105, 0
      %v109 = vadd.f32 %v104, %v107
      %v110 = vmax.f32 %v109, 0.0
      %111 = vst [vmem:[#allocation3] sm:$0xff] %v110
    $region21: #{linear_relu.1} parent=1 // pred_fallthru
      _
    // Predicated region
    $region22: #{linear_relu.1} parent=1 // pred_check
      _
    $region23: #{linear_relu.1} parent=1 // pred_check_branch
      %113 = sbr.rel (0) target = $region25
    $region24: #{linear_relu.1} parent=1 // pred_region
      %115 = vsyncadd [#allocation4], 0
      %s117 = sshll.u32 [#allocation3], 4
      %s118 = int_to_ptr.vmem [resolvable:$true] %s117
      %s119 = sshll.u32 %s3, 4
      %s120 = int_to_ptr.hbm [resolvable:$true] %s119
      %122 = dma.vmem_to_hbm [thread:$0]  %s118, 128, %s120, [#allocation4]
    $region25: #{linear_relu.1} parent=1 // pred_fallthru
      _
    // Predicated region
    $region26: #{linear_relu.1} parent=1 // pred_check
      _
    $region27: #{linear_relu.1} parent=1 // pred_check_branch
      %124 = sbr.rel (0) target = $region29
    $region28: #{linear_relu.1} parent=1 // pred_region
      %126 = dma.done [#allocation4], 128
    $region29: #{linear_relu.1} parent=1 // pred_fallthru
      _
    %127 = vsyncpa [#allocation4], 1

</llo_original>
